<compile_context>
chip_gen: v6e
topology: v6e:2x2x1
jax: 0.10.0
libtpu: 0.0.40
codegen_flags: <defaults>
</compile_context>

<pallas_src>
import jax
import jax.numpy as jnp
from jax import lax
from jax.experimental import pallas as pl
from jax.experimental.pallas import tpu as pltpu

# TODO(synk): the wrapped `model` is user-supplied in the original module; a
# deterministic synthetic 2-layer multi-output MLP stands in for it here.
N = 512           # batch (SHAP perturbation samples)
D_IN = 16         # input features
HIDDEN = 32       # hidden width
N_OUT = 4         # number of model outputs (multi-output head)
OUTPUT_INDEX = 2  # the output node SHAP isolates
TILE_N = 256      # batch tile (multiple of 128: fills MXU rows, lane-dense out)


def _wrapped_model_kernel(x_ref, w1_ref, b1_ref, w2r_ref, b2_ref, o_ref):
    # x_ref  : (TILE_N, D_IN)  bf16   -- streamed per grid step
    # w1_ref : (D_IN, HIDDEN)  bf16   -- resident (constant index map)
    # b1_ref : (1, HIDDEN)     f32
    # w2r_ref: (1, HIDDEN)     f32    -- selected w2 column, pre-transposed
    # b2_ref : (1, 1)          f32    -- selected b2 entry
    # o_ref  : (1, TILE_N)     f32    -- lane-dense row of selected outputs
    h = jnp.dot(x_ref[...], w1_ref[...],
                preferred_element_type=jnp.float32)         # (TILE_N, HIDDEN)
    h = jnp.maximum(h + b1_ref[...], 0.0)                   # bias + ReLU in f32
    # y_row[0, n] = sum_k w2r[0, k] * h[n, k]  ==  (h @ w2[:, idx]).T
    # Contract both last dims (A @ B^T form) so the result is already the
    # lane-dense (1, TILE_N) row -- no column extract / relayout needed.
    y_row = lax.dot_general(
        w2r_ref[...], h,
        dimension_numbers=(((1,), (1,)), ((), ())),
        preferred_element_type=jnp.float32)                 # (1, TILE_N)
    o_ref[...] = (y_row + b2_ref[...]).astype(o_ref.dtype)


def wrapped_model_forward(x, w1, b1, w2, b2, output_index=OUTPUT_INDEX,
                          tile_n=TILE_N):
    """Pallas equivalent of WrappedModel(model, output_index)(x) -> (N, 1)."""
    n, d_in = x.shape
    hidden = w1.shape[1]
    assert n % tile_n == 0, "batch must be a multiple of the batch tile"

    # Fold the column select into the parameters (free host-side slicing).
    w2_row = jnp.transpose(w2[:, output_index:output_index + 1])   # (1, HIDDEN)
    b2_sel = b2[:, output_index:output_index + 1]                  # (1, 1)

    # bf16 inputs for the first matmul; accumulation stays f32 in-kernel.
    x_bf16 = x.astype(jnp.bfloat16)
    w1_bf16 = w1.astype(jnp.bfloat16)

    out_row = pl.pallas_call(
        _wrapped_model_kernel,
        out_shape=jax.ShapeDtypeStruct((1, n), jnp.float32),
        grid_spec=pltpu.PrefetchScalarGridSpec(
            num_scalar_prefetch=0,
            grid=(n // tile_n,),
            in_specs=[
                pl.BlockSpec((tile_n, d_in), lambda i: (i, 0)),   # x: streamed
                pl.BlockSpec((d_in, hidden), lambda i: (0, 0)),   # w1: resident
                pl.BlockSpec((1, hidden), lambda i: (0, 0)),      # b1: resident
                pl.BlockSpec((1, hidden), lambda i: (0, 0)),      # w2 row
                pl.BlockSpec((1, 1), lambda i: (0, 0)),           # b2 scalar
            ],
            out_specs=pl.BlockSpec((1, tile_n), lambda i: (0, i)),
        ),
        compiler_params=pltpu.CompilerParams(
            dimension_semantics=("parallel",)),
    )(x_bf16, w1_bf16, b1, w2_row, b2_sel)

    # (1, N) -> (N, 1): pure host-side layout plumbing.
    return out_row.reshape(n, 1)


def _reference(x, w1, b1, w2, b2, output_index=OUTPUT_INDEX):
    h = jnp.maximum(x @ w1 + b1, 0.0)
    y = h @ w2 + b2
    return y[:, output_index][:, None]


if __name__ == "__main__":
    key = jax.random.PRNGKey(0)
    kx, k1, kb1, k2, kb2 = jax.random.split(key, 5)

    # Deterministic synthetic parameters for the inner multi-output MLP.
    x = jax.random.normal(kx, (N, D_IN), dtype=jnp.float32)
    w1 = jax.random.normal(k1, (D_IN, HIDDEN), dtype=jnp.float32) * 0.1
    b1 = jax.random.normal(kb1, (1, HIDDEN), dtype=jnp.float32) * 0.1
    w2 = jax.random.normal(k2, (HIDDEN, N_OUT), dtype=jnp.float32) * 0.1
    b2 = jax.random.normal(kb2, (1, N_OUT), dtype=jnp.float32) * 0.1

    out = wrapped_model_forward(x, w1, b1, w2, b2)
    out = jax.block_until_ready(out)

    ref = _reference(x, w1, b1, w2, b2)
    assert out.shape == (N, 1), out.shape
    # First matmul consumes bf16-quantized x/w1 -> compare at bf16 tolerance.
    assert jnp.allclose(out, ref, atol=2e-2, rtol=2e-2), "mismatch vs reference"

    print("KERNEL_OK")
</pallas_src>

<mosaic_0001>
module attributes {stable_mosaic.version = 11 : i64} {
  func.func @_wrapped_model_kernel(%arg0: i32, %arg1: memref<256x16xbf16, #tpu.memory_space<vmem>>, %arg2: memref<16x32xbf16, #tpu.memory_space<vmem>>, %arg3: memref<1x32xf32, #tpu.memory_space<vmem>>, %arg4: memref<1x32xf32, #tpu.memory_space<vmem>>, %arg5: memref<1x1xf32, #tpu.memory_space<vmem>>, %arg6: memref<1x256xf32, #tpu.memory_space<vmem>>) attributes {dimension_semantics = [#tpu.dimension_semantics<parallel>], iteration_bounds = array<i64: 2>, scalar_prefetch = 0 : i64, scratch_operands = 0 : i64, tpu.core_type = #tpu.core_type<tc>, window_params = [{transform_indices = @transform_0, window_bounds = array<i64: 256, 16>}, {pipeline_mode = #tpu.pipeline_mode<synchronous>, transform_indices = @transform_1, window_bounds = array<i64: 16, 32>}, {pipeline_mode = #tpu.pipeline_mode<synchronous>, transform_indices = @transform_2, window_bounds = array<i64: 1, 32>}, {pipeline_mode = #tpu.pipeline_mode<synchronous>, transform_indices = @transform_3, window_bounds = array<i64: 1, 32>}, {pipeline_mode = #tpu.pipeline_mode<synchronous>, transform_indices = @transform_4, window_bounds = array<i64: 1, 1>}, {transform_indices = @transform_5, window_bounds = array<i64: 1, 256>}]} {
    %c0 = arith.constant 0 : index
    %c0_0 = arith.constant 0 : index
    %0 = vector.load %arg1[%c0, %c0_0] : memref<256x16xbf16, #tpu.memory_space<vmem>>, vector<256x16xbf16>
    %c0_1 = arith.constant 0 : index
    %c0_2 = arith.constant 0 : index
    %1 = vector.load %arg2[%c0_1, %c0_2] : memref<16x32xbf16, #tpu.memory_space<vmem>>, vector<16x32xbf16>
    %cst = arith.constant dense<0.000000e+00> : vector<256x32xf32>
    %2 = tpu.matmul %0, %1, %cst {dimension_numbers = #tpu.dot_dimension_numbers<[1], [0], [0], [1], [0, 0, 1, 1], [], []>} : vector<256x16xbf16>, vector<16x32xbf16>, vector<256x32xf32> -> vector<256x32xf32>
    %c0_3 = arith.constant 0 : index
    %c0_4 = arith.constant 0 : index
    %3 = vector.load %arg3[%c0_3, %c0_4] : memref<1x32xf32, #tpu.memory_space<vmem>>, vector<1x32xf32>
    %4 = vector.broadcast %3 : vector<1x32xf32> to vector<256x32xf32>
    %5 = arith.addf %2, %4 : vector<256x32xf32>
    %cst_5 = arith.constant 0.000000e+00 : f32
    %6 = vector.broadcast %cst_5 : f32 to vector<256x32xf32>
    %7 = arith.maximumf %5, %6 : vector<256x32xf32>
    %c0_6 = arith.constant 0 : index
    %c0_7 = arith.constant 0 : index
    %8 = vector.load %arg4[%c0_6, %c0_7] : memref<1x32xf32, #tpu.memory_space<vmem>>, vector<1x32xf32>
    %cst_8 = arith.constant dense<0.000000e+00> : vector<1x256xf32>
    %9 = tpu.matmul %8, %7, %cst_8 {dimension_numbers = #tpu.dot_dimension_numbers<[1], [1], [0], [0], [0, 0, 1, 0], [], []>} : vector<1x32xf32>, vector<256x32xf32>, vector<1x256xf32> -> vector<1x256xf32>
    %c0_9 = arith.constant 0 : index
    %c0_10 = arith.constant 0 : index
    %10 = vector.load %arg5[%c0_9, %c0_10] : memref<1x1xf32, #tpu.memory_space<vmem>>, vector<1x1xf32>
    %11 = vector.broadcast %10 : vector<1x1xf32> to vector<1x256xf32>
    %12 = arith.addf %9, %11 : vector<1x256xf32>
    %c0_11 = arith.constant 0 : index
    %c0_12 = arith.constant 0 : index
    %13 = vector.load %arg6[%c0_11, %c0_12] : memref<1x256xf32, #tpu.memory_space<vmem>>, vector<1x256xf32>
    tpu.vector_store %arg6[%c0_11, %c0_12], %12 {strides = array<i32>} : memref<1x256xf32, #tpu.memory_space<vmem>>, vector<1x256xf32>,
    return
  }
  func.func @transform_0(%arg0: i32) -> (i32, i32) {
    %c0_i32 = arith.constant 0 : i32
    %c0_i32_0 = arith.constant 0 : i32
    return %arg0, %c0_i32 : i32, i32
  }
  func.func @transform_1(%arg0: i32) -> (i32, i32) {
    %c0_i32 = arith.constant 0 : i32
    %c0_i32_0 = arith.constant 0 : i32
    %c0_i32_1 = arith.constant 0 : i32
    return %c0_i32, %c0_i32_0 : i32, i32
  }
  func.func @transform_2(%arg0: i32) -> (i32, i32) {
    %c0_i32 = arith.constant 0 : i32
    %c0_i32_0 = arith.constant 0 : i32
    %c0_i32_1 = arith.constant 0 : i32
    return %c0_i32, %c0_i32_0 : i32, i32
  }
  func.func @transform_3(%arg0: i32) -> (i32, i32) {
    %c0_i32 = arith.constant 0 : i32
    %c0_i32_0 = arith.constant 0 : i32
    %c0_i32_1 = arith.constant 0 : i32
    return %c0_i32, %c0_i32_0 : i32, i32
  }
  func.func @transform_4(%arg0: i32) -> (i32, i32) {
    %c0_i32 = arith.constant 0 : i32
    %c0_i32_0 = arith.constant 0 : i32
    %c0_i32_1 = arith.constant 0 : i32
    return %c0_i32, %c0_i32_0 : i32, i32
  }
  func.func @transform_5(%arg0: i32) -> (i32, i32) {
    %c0_i32 = arith.constant 0 : i32
    %c0_i32_0 = arith.constant 0 : i32
    return %c0_i32, %arg0 : i32, i32
  }
}

</mosaic_0001>

<llo_original>
// kernel: tpu_custom_call.1
$region0: #{tpu_custom_call.1}
  #allocation0 [shape = 'u32[]', space=smem, size = 0x4, offset = 0x4, fixed_abs, tag = 'smem constant byte address 0x4 - core index']
  #allocation1 [shape = 'u32[144,128]{1,0:T(1,128)}', space=vmem, size = 0x12000, scoped, tag = 'internal scratch']
  #allocation2 [shape = 'f32[1,1]{1,0:T(1,128)S(1)}', space=vmem, size = 0x200, scoped, tag = 'scoped memory for tpu_custom_call.1']
  %s0 = inlined_call_operand.vmem [shape: bf16[512,16], index: 0, kind: input, shape index: {}]
  %s1 = inlined_call_operand.vmem [shape: bf16[16,32], index: 1, kind: input, shape index: {}]
  %s2 = inlined_call_operand.vmem [shape: f32[1,32], index: 2, kind: input, shape index: {}]
  %s3 = inlined_call_operand.vmem [shape: f32[1,32], index: 3, kind: input, shape index: {}]
  %s4 = inlined_call_operand.<no memory space> [shape: f32[1,1], index: 4, kind: input, shape index: {}]
  %s5 = inlined_call_operand.hbm [shape: f32[1,512], index: 5, kind: output, shape index: {}]
  %s6 = sld [smem:[#allocation0]]
  $region53: #{tpu_custom_call.1} parent=0
    _
  %s8 = ssub.s32 1, %s6
  %s9 = scalar_select 0, %s8, %s6
  %v10 = vstv %s4
  %11 = vst [vmem:[#allocation2] sm:$0x1] %v10
  $region1: #{tpu_custom_call.1} parent=0
    #allocation3 [shape = 'u8[2048]{0}', space=vmem, size = 0x800, scoped, tag = 'output window, operand 0']
    #allocation4 [shape = 's32[2]{0}', space=sflag, size = 0x8, scoped, tag = 'scoped memory for tpu_custom_call.1']
    %12 = vsyncpa [#allocation4], 0
    %s13 = scalar_lea.sflag [#allocation4], 1
    %14 = vsyncpa %s13, 0
    loop: start=0, step=1, limit=4
    $region2: #{tpu_custom_call.1} parent=1 // loop_pre_header
      _
    $region3: #{tpu_custom_call.1} parent=1 // loop_header
      %s16 = sphi 0, %s20
      %p17 = scmp.ge.s32.totalorder %s16, 4
      %s26 = sphi 0, %s28
      %s29 = sphi 0, %s26
      %s30 = sphi 0, %s29
      %s46 = sphi 0, %s30
      %s50 = sphi 0, %s50
      %s52 = sphi 0, %s50
      %s53 = sphi 0, %s52
      %s67 = sphi 0, %s53
      %s71 = sphi 0, %s71
      %s73 = sphi 0, %s71
      %s74 = sphi 0, %s73
      %s88 = sphi 0, %s74
      %s92 = sphi 0, %s92
      %s94 = sphi 0, %s92
      %s95 = sphi 0, %s94
      %s109 = sphi 0, %s95
      %s113 = sphi 0, %s113
      %s115 = sphi 0, %s113
      %s116 = sphi 0, %s115
      %s130 = sphi 0, %s116
      %s136 = sphi 0, %s138
      %s139 = sphi 0, %s136
      %s140 = sphi 0, %s139
      %s156 = sphi 0, %s140
    $region4: #{tpu_custom_call.1} parent=1 // loop_header_branch
      %19 = sbr.rel (%p17) target = $region8
    $region5: #{tpu_custom_call.1} parent=1 // loop_body
      %s21 = ssub.s32 %s16, 1
      %s22 = ssub.s32 %s16, 2
      %s23 = sadd.s32 %s16, 1
      %s24 = ssub.s32 %s16, %s23
      %p25 = scmp.eq.s32.totalorder %s24, 0
      %s27 = sadd.s32 %s26, 1
      %s28 = scalar_select %p25, %s26, %s27
      %p31 = pneg %p25
      %p32 = scmp.eq.s32.totalorder %s16, 1
      %p33 = por %p31, %p32
      %p34 = scmp.ne.s32.totalorder %s26, %s29
      %p35 = scmp.eq.s32.totalorder %s16, 0
      %p36 = por %p34, %p35
      %p37 = scmp.ne.s32.totalorder %s26, %s29
      %p38 = scmp.eq.s32.totalorder %s21, 1
      %p39 = por %p37, %p38
      %p40 = scmp.ne.s32.totalorder %s29, %s30
      %p41 = scmp.eq.s32.totalorder %s21, 0
      %p42 = por %p40, %p41
      %p43 = scmp.ne.s32.totalorder %s29, %s30
      %p44 = scmp.eq.s32.totalorder %s22, 1
      %p45 = por %p43, %p44
      %p47 = scmp.ne.s32.totalorder %s30, %s46
      %p48 = scmp.eq.s32.totalorder %s22, 0
      %p49 = por %p47, %p48
      %s51 = sadd.s32 %s50, 1
      %p54 = scmp.eq.s32.totalorder %s16, 1
      %p55 = scmp.ne.s32.totalorder %s50, %s52
      %p56 = scmp.eq.s32.totalorder %s16, 0
      %p57 = por %p55, %p56
      %p58 = scmp.ne.s32.totalorder %s50, %s52
      %p59 = scmp.eq.s32.totalorder %s21, 1
      %p60 = por %p58, %p59
      %p61 = scmp.ne.s32.totalorder %s52, %s53
      %p62 = scmp.eq.s32.totalorder %s21, 0
      %p63 = por %p61, %p62
      %p64 = scmp.ne.s32.totalorder %s52, %s53
      %p65 = scmp.eq.s32.totalorder %s22, 1
      %p66 = por %p64, %p65
      %p68 = scmp.ne.s32.totalorder %s53, %s67
      %p69 = scmp.eq.s32.totalorder %s22, 0
      %p70 = por %p68, %p69
      %s72 = sadd.s32 %s71, 1
      %p75 = scmp.eq.s32.totalorder %s16, 1
      %p76 = scmp.ne.s32.totalorder %s71, %s73
      %p77 = scmp.eq.s32.totalorder %s16, 0
      %p78 = por %p76, %p77
      %p79 = scmp.ne.s32.totalorder %s71, %s73
      %p80 = scmp.eq.s32.totalorder %s21, 1
      %p81 = por %p79, %p80
      %p82 = scmp.ne.s32.totalorder %s73, %s74
      %p83 = scmp.eq.s32.totalorder %s21, 0
      %p84 = por %p82, %p83
      %p85 = scmp.ne.s32.totalorder %s73, %s74
      %p86 = scmp.eq.s32.totalorder %s22, 1
      %p87 = por %p85, %p86
      %p89 = scmp.ne.s32.totalorder %s74, %s88
      %p90 = scmp.eq.s32.totalorder %s22, 0
      %p91 = por %p89, %p90
      %s93 = sadd.s32 %s92, 1
      %p96 = scmp.eq.s32.totalorder %s16, 1
      %p97 = scmp.ne.s32.totalorder %s92, %s94
      %p98 = scmp.eq.s32.totalorder %s16, 0
      %p99 = por %p97, %p98
      %p100 = scmp.ne.s32.totalorder %s92, %s94
      %p101 = scmp.eq.s32.totalorder %s21, 1
      %p102 = por %p100, %p101
      %p103 = scmp.ne.s32.totalorder %s94, %s95
      %p104 = scmp.eq.s32.totalorder %s21, 0
      %p105 = por %p103, %p104
      %p106 = scmp.ne.s32.totalorder %s94, %s95
      %p107 = scmp.eq.s32.totalorder %s22, 1
      %p108 = por %p106, %p107
      %p110 = scmp.ne.s32.totalorder %s95, %s109
      %p111 = scmp.eq.s32.totalorder %s22, 0
      %p112 = por %p110, %p111
      %s114 = sadd.s32 %s113, 1
      %p117 = scmp.eq.s32.totalorder %s16, 1
      %p118 = scmp.ne.s32.totalorder %s113, %s115
      %p119 = scmp.eq.s32.totalorder %s16, 0
      %p120 = por %p118, %p119
      %p121 = scmp.ne.s32.totalorder %s113, %s115
      %p122 = scmp.eq.s32.totalorder %s21, 1
      %p123 = por %p121, %p122
      %p124 = scmp.ne.s32.totalorder %s115, %s116
      %p125 = scmp.eq.s32.totalorder %s21, 0
      %p126 = por %p124, %p125
      %p127 = scmp.ne.s32.totalorder %s115, %s116
      %p128 = scmp.eq.s32.totalorder %s22, 1
      %p129 = por %p127, %p128
      %p131 = scmp.ne.s32.totalorder %s116, %s130
      %p132 = scmp.eq.s32.totalorder %s22, 0
      %p133 = por %p131, %p132
      %s134 = ssub.s32 %s16, %s23
      %p135 = scmp.eq.s32.totalorder %s134, 0
      %s137 = sadd.s32 %s136, 1
      %s138 = scalar_select %p135, %s136, %s137
      %p141 = pneg %p135
      %p142 = scmp.eq.s32.totalorder %s16, 1
      %p143 = por %p141, %p142
      %p144 = scmp.ne.s32.totalorder %s136, %s139
      %p145 = scmp.eq.s32.totalorder %s16, 0
      %p146 = por %p144, %p145
      %p147 = scmp.ne.s32.totalorder %s136, %s139
      %p148 = scmp.eq.s32.totalorder %s21, 1
      %p149 = por %p147, %p148
      %p150 = scmp.ne.s32.totalorder %s139, %s140
      %p151 = scmp.eq.s32.totalorder %s21, 0
      %p152 = por %p150, %p151
      %p153 = scmp.ne.s32.totalorder %s139, %s140
      %p154 = scmp.eq.s32.totalorder %s22, 1
      %p155 = por %p153, %p154
      %p157 = scmp.ne.s32.totalorder %s140, %s156
      %p158 = scmp.eq.s32.totalorder %s22, 0
      %p159 = por %p157, %p158
      %p160 = scmp.le.s32.totalorder 1, %s16
      %p161 = scmp.lt.s32.totalorder %s16, 3
      %p162 = pnand %p160, %p161
      %p163 = pneg %p162
      // Predicated region
      $region9: #{tpu_custom_call.1} parent=5 // pred_check
        _
      $region10: #{tpu_custom_call.1} parent=5 // pred_check_branch
        %165 = sbr.rel (%p162) target = $region12
      $region11: #{tpu_custom_call.1} parent=5 // pred_region
        %s166 = ssub.s32 %s16, 1
        // Predicated region
        $region13: #{tpu_custom_call.1} parent=11 // pred_check
          %p167 = pneg %p63
        $region14: #{tpu_custom_call.1} parent=11 // pred_check_branch
          %169 = sbr.rel (%p167) target = $region16
        $region15: #{tpu_custom_call.1} parent=11 // pred_region
          _
        $region16: #{tpu_custom_call.1} parent=11 // pred_fallthru
          _
        // Predicated region
        $region17: #{tpu_custom_call.1} parent=11 // pred_check
          %p170 = pneg %p84
        $region18: #{tpu_custom_call.1} parent=11 // pred_check_branch
          %172 = sbr.rel (%p170) target = $region20
        $region19: #{tpu_custom_call.1} parent=11 // pred_region
          _
        $region20: #{tpu_custom_call.1} parent=11 // pred_fallthru
          _
        // Predicated region
        $region21: #{tpu_custom_call.1} parent=11 // pred_check
          %p173 = pneg %p105
        $region22: #{tpu_custom_call.1} parent=11 // pred_check_branch
          %175 = sbr.rel (%p173) target = $region24
        $region23: #{tpu_custom_call.1} parent=11 // pred_region
          _
        $region24: #{tpu_custom_call.1} parent=11 // pred_fallthru
          _
        // Predicated region
        $region25: #{tpu_custom_call.1} parent=11 // pred_check
          %p176 = pneg %p126
        $region26: #{tpu_custom_call.1} parent=11 // pred_check_branch
          %178 = sbr.rel (%p176) target = $region28
        $region27: #{tpu_custom_call.1} parent=11 // pred_region
          _
        $region28: #{tpu_custom_call.1} parent=11 // pred_fallthru
          _
      $region12: #{tpu_custom_call.1} parent=5 // pred_fallthru
        _
      %p179 = scmp.lt.s32.totalorder %s16, 2
      // Predicated region
      $region29: #{tpu_custom_call.1} parent=5 // pred_check
        %p180 = pneg %p179
      $region30: #{tpu_custom_call.1} parent=5 // pred_check_branch
        %182 = sbr.rel (%p180) target = $region32
      $region31: #{tpu_custom_call.1} parent=5 // pred_region
        // Predicated region
        $region33: #{tpu_custom_call.1} parent=31 // pred_check
          %p183 = pneg %p36
        $region34: #{tpu_custom_call.1} parent=31 // pred_check_branch
          %185 = sbr.rel (%p183) target = $region36
        $region35: #{tpu_custom_call.1} parent=31 // pred_region
          %s186 = smul.u32 32, %s16
          %p187 = scmp.lt.s32.totalorder %s186, 63
          %s188 = scalar_select %p187, %s186, 63
          %s189 = smul.addr %s188, 4
          %s190 = scalar_lea.vmem %s0, %s189
          %s191 = smul.u32 32, %s16
        $region36: #{tpu_custom_call.1} parent=31 // pred_fallthru
          _
      $region32: #{tpu_custom_call.1} parent=5 // pred_fallthru
        _
      %p192 = scmp.le.s32.totalorder 1, %s16
      %p193 = scmp.lt.s32.totalorder %s16, 3
      %p194 = pnand %p192, %p193
      %p195 = pneg %p194
      // Predicated region
      $region37: #{tpu_custom_call.1} parent=5 // pred_check
        _
      $region38: #{tpu_custom_call.1} parent=5 // pred_check_branch
        %197 = sbr.rel (%p194) target = $region40
      $region39: #{tpu_custom_call.1} parent=5 // pred_region
        %s198 = ssub.s32 %s16, 1
        %s199 = smul.u32 32, %s21
        %p200 = scmp.lt.s32.totalorder %s199, 63
        %s201 = scalar_select %p200, %s199, 63
        %s202 = smul.addr %s201, 4
        %s203 = scalar_lea.vmem %s0, %s202
        %p204 = pneg %p42
        %p205 = pneg %p39
        %p206 = pneg %p63
        %p207 = pneg %p60
        %p208 = pneg %p84
        %p209 = pneg %p81
        %p210 = pneg %p105
        %p211 = pneg %p102
        %p212 = pneg %p126
        %p213 = pneg %p123
        %p214 = pneg %p152
        %p215 = pneg %p149
        %s216 = sand.u32 %s139, 1
        %s217 = scalar_lea.sflag [#allocation4], %s216
        %s218 = sand.u32 %s139, 1
        %s219 = smul.addr %s218, 2
        %s220 = scalar_lea.vmem [#allocation3], %s219
        %s221 = smul.u32 32, %s21
        %p222 = scmp.lt.s32.totalorder %s221, 63
        %s223 = scalar_select %p222, %s221, 63
        %s224 = smul.addr %s223, 4
        %s225 = scalar_lea.vmem %s0, %s224
        %s226 = smul.u32 32, %s21
        %s227 = smul.u32 2, %s21
        %v229 = vld [vmem:[%s225] sm:$0xf]
        %v230 = vld [vmem:[%s225 + $0x4] sm:$0xf]
        %v231 = vld [vmem:[%s225 + $0x8] sm:$0xf]
        %v232 = vld [vmem:[%s225 + $0xc] sm:$0xf]
        %v233 = vld [vmem:[%s225 + $0x10] sm:$0xf]
        %v234 = vld [vmem:[%s225 + $0x14] sm:$0xf]
        %v235 = vld [vmem:[%s225 + $0x18] sm:$0xf]
        %v236 = vld [vmem:[%s225 + $0x1c] sm:$0xf]
        %v237 = vld [vmem:[%s225 + $0x20] sm:$0xf]
        %v238 = vld [vmem:[%s225 + $0x24] sm:$0xf]
        %v239 = vld [vmem:[%s225 + $0x28] sm:$0xf]
        %v240 = vld [vmem:[%s225 + $0x2c] sm:$0xf]
        %v241 = vld [vmem:[%s225 + $0x30] sm:$0xf]
        %v242 = vld [vmem:[%s225 + $0x34] sm:$0xf]
        %v243 = vld [vmem:[%s225 + $0x38] sm:$0xf]
        %v244 = vld [vmem:[%s225 + $0x3c] sm:$0xf]
        %v245 = vld [vmem:[%s225 + $0x40] sm:$0xf]
        %v246 = vld [vmem:[%s225 + $0x44] sm:$0xf]
        %v247 = vld [vmem:[%s225 + $0x48] sm:$0xf]
        %v248 = vld [vmem:[%s225 + $0x4c] sm:$0xf]
        %v249 = vld [vmem:[%s225 + $0x50] sm:$0xf]
        %v250 = vld [vmem:[%s225 + $0x54] sm:$0xf]
        %v251 = vld [vmem:[%s225 + $0x58] sm:$0xf]
        %v252 = vld [vmem:[%s225 + $0x5c] sm:$0xf]
        %v253 = vld [vmem:[%s225 + $0x60] sm:$0xf]
        %v254 = vld [vmem:[%s225 + $0x64] sm:$0xf]
        %v255 = vld [vmem:[%s225 + $0x68] sm:$0xf]
        %v256 = vld [vmem:[%s225 + $0x6c] sm:$0xf]
        %v257 = vld [vmem:[%s225 + $0x70] sm:$0xf]
        %v258 = vld [vmem:[%s225 + $0x74] sm:$0xf]
        %v259 = vld [vmem:[%s225 + $0x78] sm:$0xf]
        %v260 = vld [vmem:[%s225 + $0x7c] sm:$0xf]
        %v261 = vld [vmem:[%s1] sm:$0xf]
        %v262 = vld [vmem:[%s1 + $0x4] sm:$0xf]
        %v263 = vld [vmem:[%s2] sm:$0x1]
        %v265 = vlaneseq
        %v266 = vshrl.u32 %v265, 7
        %v267 = vsub.s32 0, %v266
        %v268 = vrot.slane %v263, %v267
        %v302 = vunpack.c.l.b16 %v229
        %v303 = vunpack.c.l.b16 %v230
        %v304 = vunpack.c.l.b16 %v231
        %v305 = vunpack.c.l.b16 %v232
        %v306 = vunpack.c.l.b16 %v233
        %v307 = vunpack.c.l.b16 %v234
        %v308 = vunpack.c.l.b16 %v235
        %v309 = vunpack.c.l.b16 %v236
        %v310 = vunpack.c.l.b16 %v237
        %v311 = vunpack.c.l.b16 %v238
        %v312 = vunpack.c.l.b16 %v239
        %v313 = vunpack.c.l.b16 %v240
        %v314 = vunpack.c.l.b16 %v241
        %v315 = vunpack.c.l.b16 %v242
        %v316 = vunpack.c.l.b16 %v243
        %v317 = vunpack.c.l.b16 %v244
        %v318 = vunpack.c.l.b16 %v245
        %v319 = vunpack.c.l.b16 %v246
        %v320 = vunpack.c.l.b16 %v247
        %v321 = vunpack.c.l.b16 %v248
        %v322 = vunpack.c.l.b16 %v249
        %v323 = vunpack.c.l.b16 %v250
        %v324 = vunpack.c.l.b16 %v251
        %v325 = vunpack.c.l.b16 %v252
        %v326 = vunpack.c.l.b16 %v253
        %v327 = vunpack.c.l.b16 %v254
        %v328 = vunpack.c.l.b16 %v255
        %v329 = vunpack.c.l.b16 %v256
        %v330 = vunpack.c.l.b16 %v257
        %v331 = vunpack.c.l.b16 %v258
        %v332 = vunpack.c.l.b16 %v259
        %v333 = vunpack.c.l.b16 %v260
        %v334 = vpack.c.b16 %v303, %v302
        %v335 = vpack.c.b16 %v305, %v304
        %v336 = vpack.c.b16 %v307, %v306
        %v337 = vpack.c.b16 %v309, %v308
        %v338 = vpack.c.b16 %v311, %v310
        %v339 = vpack.c.b16 %v313, %v312
        %v340 = vpack.c.b16 %v315, %v314
        %v341 = vpack.c.b16 %v317, %v316
        %v342 = vpack.c.b16 %v319, %v318
        %v343 = vpack.c.b16 %v321, %v320
        %v344 = vpack.c.b16 %v323, %v322
        %v345 = vpack.c.b16 %v325, %v324
        %v346 = vpack.c.b16 %v327, %v326
        %v347 = vpack.c.b16 %v329, %v328
        %v348 = vpack.c.b16 %v331, %v330
        %v349 = vpack.c.b16 %v333, %v332
        %v352 = vunpack.c.l.b16 %v261
        %v353 = vunpack.c.l.b16 %v262
        %v354 = vpack.c.b16 %v353, %v352
        %vm356 = vcmask 130048
        %v358 = vsel %vm356, %v334, 0
        %v361 = vsel %vm356, %v335, 0
        %v364 = vsel %vm356, %v336, 0
        %v367 = vsel %vm356, %v337, 0
        %v370 = vsel %vm356, %v338, 0
        %v373 = vsel %vm356, %v339, 0
        %v376 = vsel %vm356, %v340, 0
        %v379 = vsel %vm356, %v341, 0
        %v382 = vsel %vm356, %v342, 0
        %v385 = vsel %vm356, %v343, 0
        %v388 = vsel %vm356, %v344, 0
        %v391 = vsel %vm356, %v345, 0
        %v394 = vsel %vm356, %v346, 0
        %v397 = vsel %vm356, %v347, 0
        %v400 = vsel %vm356, %v348, 0
        %v403 = vsel %vm356, %v349, 0
        %405 = vmatprep.subr.bf16.mxu0 0
        %406 = vmatpush1.bf16.msra.mxu0 0
        %407 = vmatprep.subr.bf16.mxu0 0
        %408 = vmatpush1.bf16.msra.mxu0 0
        %409 = vmatprep.subr.bf16.mxu0 0
        %410 = vmatpush1.bf16.msra.mxu0 0
        %411 = vmatprep.subr.bf16.mxu0 0
        %412 = vmatpush1.bf16.msra.mxu0 0
        %413 = vmatprep.subr.bf16.mxu0 0
        %414 = vmatpush1.bf16.msra.mxu0 0
        %415 = vmatprep.subr.bf16.mxu0 0
        %416 = vmatpush1.bf16.msra.mxu0 0
        %417 = vmatprep.subr.bf16.mxu0 0
        %418 = vmatpush1.bf16.msra.mxu0 0
        %419 = vmatprep.subr.bf16.mxu0 0
        %420 = vmatpush1.bf16.msra.mxu0 %v354
        %421 = vmatprep.subr.bf16.mxu0 0
        %422 = vmatpush2.bf16.msra.mxu0 0
        %423 = vmatprep.subr.bf16.mxu0 0
        %424 = vmatpush2.bf16.msra.mxu0 0
        %425 = vmatprep.subr.bf16.mxu0 0
        %426 = vmatpush2.bf16.msra.mxu0 0
        %427 = vmatprep.subr.bf16.mxu0 0
        %428 = vmatpush2.bf16.msra.mxu0 0
        %429 = vmatprep.subr.bf16.mxu0 0
        %430 = vmatpush2.bf16.msra.mxu0 0
        %431 = vmatprep.subr.bf16.mxu0 0
        %432 = vmatpush2.bf16.msra.mxu0 0
        %433 = vmatprep.subr.bf16.mxu0 0
        %434 = vmatpush2.bf16.msra.mxu0 0
        %435 = vmatprep.subr.bf16.mxu0 0
        %436 = vmatpush2.bf16.msra.mxu0 0
        %437 = vmatprep.mubr.bf16.mxu0 0
        %438 = vmatmul.mubr.bf16.gmra.mxu0 %v358
        %v439 = vpop.f32.mrf.mxu0
        %v440 = vadd.f32 %v268, %v439
        %v441 = vpop.f32.mrf.mxu0
        %v442 = vpop.f32.mrf.mxu0
        %v443 = vadd.f32 %v268, %v442
        %v444 = vpop.f32.mrf.mxu0
        %445 = vmatprep.mubr.bf16.mxu0 0
        %446 = vmatmul.mubr.bf16.gmra.mxu0 %v361
        %v447 = vpop.f32.mrf.mxu0
        %v448 = vadd.f32 %v268, %v447
        %v449 = vpop.f32.mrf.mxu0
        %v450 = vpop.f32.mrf.mxu0
        %v451 = vadd.f32 %v268, %v450
        %v452 = vpop.f32.mrf.mxu0
        %453 = vmatprep.mubr.bf16.mxu0 0
        %454 = vmatmul.mubr.bf16.gmra.mxu0 %v364
        %v455 = vpop.f32.mrf.mxu0
        %v456 = vadd.f32 %v268, %v455
        %v457 = vpop.f32.mrf.mxu0
        %v458 = vpop.f32.mrf.mxu0
        %v459 = vadd.f32 %v268, %v458
        %v460 = vpop.f32.mrf.mxu0
        %461 = vmatprep.mubr.bf16.mxu0 0
        %462 = vmatmul.mubr.bf16.gmra.mxu0 %v367
        %v463 = vpop.f32.mrf.mxu0
        %v464 = vadd.f32 %v268, %v463
        %v465 = vpop.f32.mrf.mxu0
        %v466 = vpop.f32.mrf.mxu0
        %v467 = vadd.f32 %v268, %v466
        %v468 = vpop.f32.mrf.mxu0
        %469 = vmatprep.mubr.bf16.mxu0 0
        %470 = vmatmul.mubr.bf16.gmra.mxu0 %v370
        %v471 = vpop.f32.mrf.mxu0
        %v472 = vadd.f32 %v268, %v471
        %v473 = vpop.f32.mrf.mxu0
        %v474 = vpop.f32.mrf.mxu0
        %v475 = vadd.f32 %v268, %v474
        %v476 = vpop.f32.mrf.mxu0
        %477 = vmatprep.mubr.bf16.mxu0 0
        %478 = vmatmul.mubr.bf16.gmra.mxu0 %v373
        %v479 = vpop.f32.mrf.mxu0
        %v480 = vadd.f32 %v268, %v479
        %v481 = vpop.f32.mrf.mxu0
        %v482 = vpop.f32.mrf.mxu0
        %v483 = vadd.f32 %v268, %v482
        %v484 = vpop.f32.mrf.mxu0
        %485 = vmatprep.mubr.bf16.mxu0 0
        %486 = vmatmul.mubr.bf16.gmra.mxu0 %v376
        %v487 = vpop.f32.mrf.mxu0
        %v488 = vadd.f32 %v268, %v487
        %v489 = vpop.f32.mrf.mxu0
        %v490 = vpop.f32.mrf.mxu0
        %v491 = vadd.f32 %v268, %v490
        %v492 = vpop.f32.mrf.mxu0
        %493 = vmatprep.mubr.bf16.mxu0 0
        %494 = vmatmul.mubr.bf16.gmra.mxu0 %v379
        %v495 = vpop.f32.mrf.mxu0
        %v496 = vadd.f32 %v268, %v495
        %v497 = vpop.f32.mrf.mxu0
        %v498 = vpop.f32.mrf.mxu0
        %v499 = vadd.f32 %v268, %v498
        %v500 = vpop.f32.mrf.mxu0
        %501 = vmatprep.mubr.bf16.mxu0 0
        %502 = vmatmul.mubr.bf16.gmra.mxu0 %v382
        %v503 = vpop.f32.mrf.mxu0
        %v504 = vadd.f32 %v268, %v503
        %v505 = vpop.f32.mrf.mxu0
        %v506 = vpop.f32.mrf.mxu0
        %v507 = vadd.f32 %v268, %v506
        %v508 = vpop.f32.mrf.mxu0
        %509 = vmatprep.mubr.bf16.mxu0 0
        %510 = vmatmul.mubr.bf16.gmra.mxu0 %v385
        %v511 = vpop.f32.mrf.mxu0
        %v512 = vadd.f32 %v268, %v511
        %v513 = vpop.f32.mrf.mxu0
        %v514 = vpop.f32.mrf.mxu0
        %v515 = vadd.f32 %v268, %v514
        %v516 = vpop.f32.mrf.mxu0
        %517 = vmatprep.mubr.bf16.mxu0 0
        %518 = vmatmul.mubr.bf16.gmra.mxu0 %v388
        %v519 = vpop.f32.mrf.mxu0
        %v520 = vadd.f32 %v268, %v519
        %v521 = vpop.f32.mrf.mxu0
        %v522 = vpop.f32.mrf.mxu0
        %v523 = vadd.f32 %v268, %v522
        %v524 = vpop.f32.mrf.mxu0
        %525 = vmatprep.mubr.bf16.mxu0 0
        %526 = vmatmul.mubr.bf16.gmra.mxu0 %v391
        %v527 = vpop.f32.mrf.mxu0
        %v528 = vadd.f32 %v268, %v527
        %v529 = vpop.f32.mrf.mxu0
        %v530 = vpop.f32.mrf.mxu0
        %v531 = vadd.f32 %v268, %v530
        %v532 = vpop.f32.mrf.mxu0
        %533 = vmatprep.mubr.bf16.mxu0 0
        %534 = vmatmul.mubr.bf16.gmra.mxu0 %v394
        %v535 = vpop.f32.mrf.mxu0
        %v536 = vadd.f32 %v268, %v535
        %v537 = vpop.f32.mrf.mxu0
        %v538 = vpop.f32.mrf.mxu0
        %v539 = vadd.f32 %v268, %v538
        %v540 = vpop.f32.mrf.mxu0
        %541 = vmatprep.mubr.bf16.mxu0 0
        %542 = vmatmul.mubr.bf16.gmra.mxu0 %v397
        %v543 = vpop.f32.mrf.mxu0
        %v544 = vadd.f32 %v268, %v543
        %v545 = vpop.f32.mrf.mxu0
        %v546 = vpop.f32.mrf.mxu0
        %v547 = vadd.f32 %v268, %v546
        %v548 = vpop.f32.mrf.mxu0
        %549 = vmatprep.mubr.bf16.mxu0 0
        %550 = vmatmul.mubr.bf16.gmra.mxu0 %v400
        %v551 = vpop.f32.mrf.mxu0
        %v552 = vadd.f32 %v268, %v551
        %v553 = vpop.f32.mrf.mxu0
        %v554 = vpop.f32.mrf.mxu0
        %v555 = vadd.f32 %v268, %v554
        %v556 = vpop.f32.mrf.mxu0
        %557 = vmatprep.mubr.bf16.mxu0 0
        %558 = vmatmul.mubr.bf16.gmra.mxu0 %v403
        %v559 = vpop.f32.mrf.mxu0
        %v560 = vadd.f32 %v268, %v559
        %v561 = vpop.f32.mrf.mxu0
        %v562 = vpop.f32.mrf.mxu0
        %v563 = vadd.f32 %v268, %v562
        %v564 = vpop.f32.mrf.mxu0
        %565 = vdwg.mxu0
        %v566 = vmax.f32 %v440, 0.0
        %v567 = vmax.f32 %v443, 0.0
        %v568 = vmax.f32 %v448, 0.0
        %v569 = vmax.f32 %v451, 0.0
        %v570 = vmax.f32 %v456, 0.0
        %v571 = vmax.f32 %v459, 0.0
        %v572 = vmax.f32 %v464, 0.0
        %v573 = vmax.f32 %v467, 0.0
        %v574 = vmax.f32 %v472, 0.0
        %v575 = vmax.f32 %v475, 0.0
        %v576 = vmax.f32 %v480, 0.0
        %v577 = vmax.f32 %v483, 0.0
        %v578 = vmax.f32 %v488, 0.0
        %v579 = vmax.f32 %v491, 0.0
        %v580 = vmax.f32 %v496, 0.0
        %v581 = vmax.f32 %v499, 0.0
        %v582 = vmax.f32 %v504, 0.0
        %v583 = vmax.f32 %v507, 0.0
        %v584 = vmax.f32 %v512, 0.0
        %v585 = vmax.f32 %v515, 0.0
        %v586 = vmax.f32 %v520, 0.0
        %v587 = vmax.f32 %v523, 0.0
        %v588 = vmax.f32 %v528, 0.0
        %v589 = vmax.f32 %v531, 0.0
        %v590 = vmax.f32 %v536, 0.0
        %v591 = vmax.f32 %v539, 0.0
        %v592 = vmax.f32 %v544, 0.0
        %v593 = vmax.f32 %v547, 0.0
        %v594 = vmax.f32 %v552, 0.0
        %v595 = vmax.f32 %v555, 0.0
        %v596 = vmax.f32 %v560, 0.0
        %v597 = vmax.f32 %v563, 0.0
        %v598 = vld [vmem:[%s3] sm:$0x1]
        %v599 = vld [vmem:[#allocation2] sm:$0x1]
        %601 = vset.pattern.permute.xlu0 0
        %602 = vperm.xlu0 %601, %v599
        %v603 = vpop.permute.xlu0 %602
        %v605 = vlaneseq
        %v606 = vshrl.u32 %v605, 7
        %v607 = vsub.s32 0, %v606
        %v608 = vrot.slane %v603, %v607
        %vm609 = vcmask 261120
        %v611 = vsel %vm609, %v598, 0
        %v614 = vsel %vm609, %v566, 0
        %v617 = vsel %vm609, %v567, 0
        %v620 = vsel %vm609, %v568, 0
        %v623 = vsel %vm609, %v569, 0
        %v626 = vsel %vm609, %v570, 0
        %v629 = vsel %vm609, %v571, 0
        %v632 = vsel %vm609, %v572, 0
        %v635 = vsel %vm609, %v573, 0
        %v638 = vsel %vm609, %v574, 0
        %v641 = vsel %vm609, %v575, 0
        %v644 = vsel %vm609, %v576, 0
        %v647 = vsel %vm609, %v577, 0
        %v650 = vsel %vm609, %v578, 0
        %v653 = vsel %vm609, %v579, 0
        %v656 = vsel %vm609, %v580, 0
        %v659 = vsel %vm609, %v581, 0
        %v662 = vsel %vm609, %v582, 0
        %v665 = vsel %vm609, %v583, 0
        %v668 = vsel %vm609, %v584, 0
        %v671 = vsel %vm609, %v585, 0
        %v674 = vsel %vm609, %v586, 0
        %v677 = vsel %vm609, %v587, 0
        %v680 = vsel %vm609, %v588, 0
        %v683 = vsel %vm609, %v589, 0
        %v686 = vsel %vm609, %v590, 0
        %v689 = vsel %vm609, %v591, 0
        %v692 = vsel %vm609, %v592, 0
        %v695 = vsel %vm609, %v593, 0
        %v698 = vsel %vm609, %v594, 0
        %v701 = vsel %vm609, %v595, 0
        %v704 = vsel %vm609, %v596, 0
        %v707 = vsel %vm609, %v597, 0
        %709 = vmatprep.subr.mxu0 0.0
        %710 = vmatpush1.xpose.msra.mxu0 %v659
        %711 = vmatprep.subr.mxu0 0.0
        %712 = vmatpush1.xpose.msra.mxu0 %v656
        %713 = vmatprep.subr.mxu0 0.0
        %714 = vmatpush1.xpose.msra.mxu0 %v653
        %715 = vmatprep.subr.mxu0 0.0
        %716 = vmatpush1.xpose.msra.mxu0 %v650
        %717 = vmatprep.subr.mxu0 0.0
        %718 = vmatpush1.xpose.msra.mxu0 %v647
        %719 = vmatprep.subr.mxu0 0.0
        %720 = vmatpush1.xpose.msra.mxu0 %v644
        %721 = vmatprep.subr.mxu0 0.0
        %722 = vmatpush1.xpose.msra.mxu0 %v641
        %723 = vmatprep.subr.mxu0 0.0
        %724 = vmatpush1.xpose.msra.mxu0 %v638
        %725 = vmatprep.subr.mxu0 0.0
        %726 = vmatpush1.xpose.msra.mxu0 %v635
        %727 = vmatprep.subr.mxu0 0.0
        %728 = vmatpush1.xpose.msra.mxu0 %v632
        %729 = vmatprep.subr.mxu0 0.0
        %730 = vmatpush1.xpose.msra.mxu0 %v629
        %731 = vmatprep.subr.mxu0 0.0
        %732 = vmatpush1.xpose.msra.mxu0 %v626
        %733 = vmatprep.subr.mxu0 0.0
        %734 = vmatpush1.xpose.msra.mxu0 %v623
        %735 = vmatprep.subr.mxu0 0.0
        %736 = vmatpush1.xpose.msra.mxu0 %v620
        %737 = vmatprep.subr.mxu0 0.0
        %738 = vmatpush1.xpose.msra.mxu0 %v617
        %739 = vmatprep.subr.mxu0 0.0
        %740 = vmatpush1.xpose.msra.mxu0 %v614
        %741 = vmatprep.subr.mxu0 0.0
        %742 = vmatpush2.xpose.msra.mxu0 %v707
        %743 = vmatprep.subr.mxu0 0.0
        %744 = vmatpush2.xpose.msra.mxu0 %v704
        %745 = vmatprep.subr.mxu0 0.0
        %746 = vmatpush2.xpose.msra.mxu0 %v701
        %747 = vmatprep.subr.mxu0 0.0
        %748 = vmatpush2.xpose.msra.mxu0 %v698
        %749 = vmatprep.subr.mxu0 0.0
        %750 = vmatpush2.xpose.msra.mxu0 %v695
        %751 = vmatprep.subr.mxu0 0.0
        %752 = vmatpush2.xpose.msra.mxu0 %v692
        %753 = vmatprep.subr.mxu0 0.0
        %754 = vmatpush2.xpose.msra.mxu0 %v689
        %755 = vmatprep.subr.mxu0 0.0
        %756 = vmatpush2.xpose.msra.mxu0 %v686
        %757 = vmatprep.subr.mxu0 0.0
        %758 = vmatpush2.xpose.msra.mxu0 %v683
        %759 = vmatprep.subr.mxu0 0.0
        %760 = vmatpush2.xpose.msra.mxu0 %v680
        %761 = vmatprep.subr.mxu0 0.0
        %762 = vmatpush2.xpose.msra.mxu0 %v677
        %763 = vmatprep.subr.mxu0 0.0
        %764 = vmatpush2.xpose.msra.mxu0 %v674
        %765 = vmatprep.subr.mxu0 0.0
        %766 = vmatpush2.xpose.msra.mxu0 %v671
        %767 = vmatprep.subr.mxu0 0.0
        %768 = vmatpush2.xpose.msra.mxu0 %v668
        %769 = vmatprep.subr.mxu0 0.0
        %770 = vmatpush2.xpose.msra.mxu0 %v665
        %771 = vmatprep.subr.mxu0 0.0
        %772 = vmatpush2.xpose.msra.mxu0 %v662
        %773 = vmatprep.mubr.f32.mxu0 0.0
        %774 = vmatmul.mubr.f32.gmra.mxu0 %v611
        %v775 = vpop.f32.mrf.mxu0
        %v776 = vadd.f32 %v608, %v775
        %v777 = vpop.f32.mrf.mxu0
        %v778 = vadd.f32 %v608, %v777
        %779 = vdwg.mxu0
        %v782 = vcombine.low %v776, %v778
        %v784 = vunpack.c.l.s4 1966171168
        %v785 = vunpack.c.0.s8 %v784
        %v786 = vlaneseq
        %v787 = vshrl.u32 %v786, 7
        %v788 = vsub.s32 %v785, %v787
        %v789 = vrot.slane %v782, %v788
        %v791 = vunpack.c.l.s4 1966171168
        %v792 = vunpack.c.0.s8 %v791
        %v793 = vlaneseq
        %v794 = vshrl.u32 %v793, 7
        %v795 = vsub.s32 %v792, %v794
        %v796 = vrot.slane %v789, %v795
        %v798 = vlaneseq
        %vm799 = vcmp.ge.s32.totalorder %v798, 0
        %vm800 = vcmp.lt.s32.totalorder %v798, 256
        %vm801 = vmand %vm799, %vm800
        %802 = vst.msk [vmem:[%s220] sm:$0x3] %vm801, %v796
        %s803 = sand.u32 %s139, 1
        %s804 = scalar_lea.sflag [#allocation4], %s803
        %s805 = sand.u32 %s139, 1
        %s806 = smul.addr %s805, 2
        %s807 = scalar_lea.vmem [#allocation3], %s806
        // Predicated region
        $region41: #{tpu_custom_call.1} parent=39 // pred_check
          %p808 = pneg %p149
        $region42: #{tpu_custom_call.1} parent=39 // pred_check_branch
          %810 = sbr.rel (%p808) target = $region44
        $region43: #{tpu_custom_call.1} parent=39 // pred_region
          %s811 = smul.u32 2, %s21
          %s813 = ssub.s32 32, 32
          %814 = vsyncadd %s804, %s813
          %s815 = smul.addr %s811, 16
          %s816 = scalar_lea.hbm %s5, %s815
          %s818 = sshll.u32 %s807, 4
          %s819 = int_to_ptr.vmem [resolvable:$true] %s818
          %821 = dma.vmem_to_hbm [thread:$0]  %s819, 32, %s816, %s804
        $region44: #{tpu_custom_call.1} parent=39 // pred_fallthru
          _
      $region40: #{tpu_custom_call.1} parent=5 // pred_fallthru
        _
      %p822 = scmp.le.s32.totalorder 2, %s16
      // Predicated region
      $region45: #{tpu_custom_call.1} parent=5 // pred_check
        %p823 = pneg %p822
      $region46: #{tpu_custom_call.1} parent=5 // pred_check_branch
        %825 = sbr.rel (%p823) target = $region48
      $region47: #{tpu_custom_call.1} parent=5 // pred_region
        %s826 = ssub.s32 %s16, 2
        // Predicated region
        $region49: #{tpu_custom_call.1} parent=47 // pred_check
          %p827 = pneg %p155
        $region50: #{tpu_custom_call.1} parent=47 // pred_check_branch
          %829 = sbr.rel (%p827) target = $region52
        $region51: #{tpu_custom_call.1} parent=47 // pred_region
          %s830 = sand.u32 %s140, 1
          %s831 = scalar_lea.sflag [#allocation4], %s830
          %s832 = sand.u32 %s140, 1
          %s833 = smul.addr %s832, 2
          %s834 = scalar_lea.vmem [#allocation3], %s833
          %835 = dma.done %s831, 32
        $region52: #{tpu_custom_call.1} parent=47 // pred_fallthru
          _
      $region48: #{tpu_custom_call.1} parent=5 // pred_fallthru
        _
    $region6: #{tpu_custom_call.1} parent=1 // loop_footer
      %s20 = sadd.s32 1, %s16
    $region7: #{tpu_custom_call.1} parent=1 // loop_footer_branch
      %15 = sbr.rel target = $region3
    $region8: #{tpu_custom_call.1} parent=1 // loop_exit
      _
    %836 = vsyncpa [#allocation4], 1
    %s837 = scalar_lea.sflag [#allocation4], 1
    %838 = vsyncpa %s837, 1

</llo_original>
